<compile_context>
chip_gen: v7x
topology: tpu7x:2x2x1
jax: 0.10.0
libtpu: 0.0.40
codegen_flags: <defaults>
</compile_context>

<pallas_src>
import math
from functools import partial

import numpy as np
import jax
import jax.numpy as jnp
from jax import lax
from jax.experimental import pallas as pl
from jax.experimental.pallas import tpu as pltpu


# ------------------------------ small helpers -------------------------------

def _ru(x, m):
    return (x + m - 1) // m * m


def _pad2(a, rows, cols):
    r, c = a.shape
    if r == rows and c == cols:
        return a
    return jnp.pad(a, ((0, rows - r), (0, cols - c)))


def _erf_approx(x):
    # Abramowitz & Stegun 7.1.26 (max abs err ~1.5e-7).  Keeps nn.GELU()
    # exact-erf semantics to within f32 rounding without relying on an erf
    # lowering inside Mosaic.
    a1, a2, a3, a4, a5 = (0.254829592, -0.284496736, 1.421413741,
                          -1.453152027, 1.061405429)
    p = 0.3275911
    s = jnp.where(x < 0.0, -1.0, 1.0)
    z = jnp.abs(x)
    t = 1.0 / (1.0 + p * z)
    poly = ((((a5 * t + a4) * t + a3) * t + a2) * t + a1) * t
    return s * (1.0 - poly * jnp.exp(-z * z))


def _gelu_exact(x):
    # TODO(synk): switch to lax.erf once its Mosaic lowering is guaranteed.
    return 0.5 * x * (1.0 + _erf_approx(x * 0.7071067811865476))


# --------------------------- tiled fused matmul ------------------------------

def _matmul_kernel(*refs, gated, prologue, has_bias, has_res, norm_dim, eps):
    it = iter(refs)
    x_ref = next(it)
    w_ref = next(it)
    wu_ref = next(it) if gated else None
    g_ref = next(it) if prologue else None                    # (1, bk) f32
    b2_ref = next(it) if prologue == "ln_gelu" else None      # (1, bk) f32
    bias_ref = next(it) if has_bias else None                 # (1, bn) f32
    res_ref = next(it) if has_res else None                   # (bm, bn) bf16
    o_ref = next(it)
    acc_ref = next(it)
    accu_ref = next(it) if gated else None

    kk = pl.program_id(2)

    @pl.when(kk == 0)
    def _():
        acc_ref[...] = jnp.zeros_like(acc_ref)
        if gated:
            accu_ref[...] = jnp.zeros_like(accu_ref)

    if prologue is None:
        xb = x_ref[...]                                        # bf16 tiles
    else:
        # Whole row is in this K block (wrapper enforces bk == K); padded
        # feature columns are exact zeros so sums over the tile equal sums
        # over the real `norm_dim` columns.
        x = x_ref[...].astype(jnp.float32)
        if prologue == "rms":
            inv = lax.rsqrt(jnp.sum(x * x, axis=-1, keepdims=True) / norm_dim
                            + eps)
            xn = (x * inv) * g_ref[...]
        else:  # "ln_gelu": LayerNorm followed by exact GELU
            mu = jnp.sum(x, axis=-1, keepdims=True) / norm_dim
            var = jnp.sum(x * x, axis=-1, keepdims=True) / norm_dim - mu * mu
            xn = (x - mu) * lax.rsqrt(var + eps) * g_ref[...] + b2_ref[...]
            xn = _gelu_exact(xn)
        xb = xn.astype(jnp.bfloat16)

    acc_ref[...] += jnp.dot(xb, w_ref[...], preferred_element_type=jnp.float32)
    if gated:
        accu_ref[...] += jnp.dot(xb, wu_ref[...],
                                 preferred_element_type=jnp.float32)

    @pl.when(kk == pl.num_programs(2) - 1)
    def _():
        out = acc_ref[...]
        if gated:
            # SiluAndMul fused: silu(gate) * up
            out = out * (1.0 / (1.0 + jnp.exp(-out))) * accu_ref[...]
        if has_bias:
            out = out + bias_ref[...]
        if has_res:
            out = out + res_ref[...].astype(jnp.float32)
        o_ref[...] = out.astype(o_ref.dtype)


def matmul(x, w, w_up=None, *, bias=None, residual=None, prologue=None,
           gamma=None, beta=None, norm_dim=None, eps=1e-6,
           out_dtype=jnp.bfloat16, tm=128, tn=256, tk=512):
    """Tiled bf16 matmul.  Optional fused prologues ("rms" / "ln_gelu") and
    fused gated-SiLU / bias / residual epilogues.  Inputs are expected to be
    pre-padded (lane-dense) and bf16; weights pre-padded bf16."""
    M, K = x.shape
    N = w.shape[1]
    assert w.shape[0] == K
    gated = w_up is not None
    has_bias = bias is not None
    has_res = residual is not None

    # M tiling (token axis is already a multiple of 128 in the main pipeline).
    bm = tm if M % tm == 0 else (M if M <= tm else 128)
    Mp = _ru(M, bm)
    if Mp != M:
        x = jnp.pad(x, ((0, Mp - M), (0, 0)))
        if has_res:
            residual = jnp.pad(residual, ((0, Mp - M), (0, 0)))

    bn = tn if N % tn == 0 else (128 if (N % 128 == 0 and N > 128) else N)
    if prologue is not None:
        assert gamma is not None and norm_dim is not None
        if prologue == "ln_gelu":
            assert beta is not None
        bk = K          # fused row-norm needs the whole row in one K block
    else:
        bk = tk if K % tk == 0 else (128 if (K % 128 == 0 and K > 128) else K)

    inputs = [x, w]
    in_specs = [pl.BlockSpec((bm, bk), lambda i, j, k: (i, k)),
                pl.BlockSpec((bk, bn), lambda i, j, k: (k, j))]
    if gated:
        inputs.append(w_up)
        in_specs.append(pl.BlockSpec((bk, bn), lambda i, j, k: (k, j)))
    if prologue is not None:
        inputs.append(gamma)
        in_specs.append(pl.BlockSpec((1, bk), lambda i, j, k: (0, k)))
        if prologue == "ln_gelu":
            inputs.append(beta)
            in_specs.append(pl.BlockSpec((1, bk), lambda i, j, k: (0, k)))
    if has_bias:
        inputs.append(bias)
        in_specs.append(pl.BlockSpec((1, bn), lambda i, j, k: (0, j)))
    if has_res:
        inputs.append(residual)
        in_specs.append(pl.BlockSpec((bm, bn), lambda i, j, k: (i, j)))

    scratch = [pltpu.VMEM((bm, bn), jnp.float32)]
    if gated:
        scratch.append(pltpu.VMEM((bm, bn), jnp.float32))

    out = pl.pallas_call(
        partial(_matmul_kernel, gated=gated, prologue=prologue,
                has_bias=has_bias, has_res=has_res, norm_dim=norm_dim, eps=eps),
        grid=(Mp // bm, N // bn, K // bk),
        in_specs=in_specs,
        out_specs=pl.BlockSpec((bm, bn), lambda i, j, k: (i, j)),
        out_shape=jax.ShapeDtypeStruct((Mp, N), out_dtype),
        scratch_shapes=scratch,
        compiler_params=pltpu.CompilerParams(
            dimension_semantics=("parallel", "parallel", "arbitrary")),
    )(*inputs)
    return out[:M] if Mp != M else out


# ------------------------------- RMSNorm kernel ------------------------------

def _rmsnorm_kernel(*refs, norm_dim, eps, has_add):
    if has_add:
        x_ref, g_ref, a_ref, o_ref = refs
    else:
        x_ref, g_ref, o_ref = refs
    x = x_ref[...].astype(jnp.float32)
    inv = lax.rsqrt(jnp.sum(x * x, axis=-1, keepdims=True) / norm_dim + eps)
    y = x * inv * g_ref[...]
    if has_add:
        y = y + a_ref[...]
    o_ref[...] = y.astype(o_ref.dtype)


def rmsnorm(x, gamma, *, norm_dim, eps, add=None, tm=128):
    """Standalone RMSNorm (bf16 in/out) with an optional fused f32 add
    (used to fold the adaptive position embedding add into the post-conv
    norm)."""
    M, Dp = x.shape
    bm = tm if M % tm == 0 else M
    inputs = [x, gamma]
    in_specs = [pl.BlockSpec((bm, Dp), lambda i: (i, 0)),
                pl.BlockSpec((1, Dp), lambda i: (0, 0))]
    if add is not None:
        inputs.append(add)
        in_specs.append(pl.BlockSpec((bm, Dp), lambda i: (i, 0)))
    return pl.pallas_call(
        partial(_rmsnorm_kernel, norm_dim=norm_dim, eps=eps,
                has_add=add is not None),
        grid=(M // bm,),
        in_specs=in_specs,
        out_specs=pl.BlockSpec((bm, Dp), lambda i: (i, 0)),
        out_shape=jax.ShapeDtypeStruct((M, Dp), jnp.bfloat16),
        compiler_params=pltpu.CompilerParams(dimension_semantics=("parallel",)),
    )(*inputs)


# -------------------------------- RoPE pre-pass -------------------------------

def _rope_kernel(q_ref, k_ref, cos_ref, sin_ref, rot_ref, qo_ref, ko_ref, *,
                 scale):
    q = q_ref[0]                              # (bt, D) bf16
    k = k_ref[0]
    cos = cos_ref[...]                        # (bt, D) f32
    sin = sin_ref[...]
    rot = rot_ref[...]                        # (D, D) bf16 rotate-half matrix
    # rotate_half(x) == x @ rot (MXU permutation, no cross-lane shuffles)
    qh = jnp.dot(q, rot, preferred_element_type=jnp.float32)
    kh = jnp.dot(k, rot, preferred_element_type=jnp.float32)
    qf = q.astype(jnp.float32)
    kf = k.astype(jnp.float32)
    # softmax scale folded into q here, once, instead of per attention step
    qo_ref[0] = ((qf * cos + qh * sin) * scale).astype(jnp.bfloat16)
    ko_ref[0] = (kf * cos + kh * sin).astype(jnp.bfloat16)


def apply_rope(q, k, cos, sin, rot, scale, *, bt=128):
    """q,k: (H, Sp, D) bf16.  Returns pre-rotated (and q pre-scaled) bf16."""
    H, Sp, D = q.shape
    qr, kr = pl.pallas_call(
        partial(_rope_kernel, scale=scale),
        grid=(H, Sp // bt),
        in_specs=[pl.BlockSpec((1, bt, D), lambda h, i: (h, i, 0)),
                  pl.BlockSpec((1, bt, D), lambda h, i: (h, i, 0)),
                  pl.BlockSpec((bt, D), lambda h, i: (i, 0)),
                  pl.BlockSpec((bt, D), lambda h, i: (i, 0)),
                  pl.BlockSpec((D, D), lambda h, i: (0, 0))],
        out_specs=(pl.BlockSpec((1, bt, D), lambda h, i: (h, i, 0)),
                   pl.BlockSpec((1, bt, D), lambda h, i: (h, i, 0))),
        out_shape=(jax.ShapeDtypeStruct((H, Sp, D), jnp.bfloat16),
                   jax.ShapeDtypeStruct((H, Sp, D), jnp.bfloat16)),
        compiler_params=pltpu.CompilerParams(
            dimension_semantics=("parallel", "parallel")),
    )(q, k, cos, sin, rot)
    return qr, kr


# ------------------ flash attention with prefetched KV ranges ----------------

def _flash_attn_kernel(kv_lo_ref, kv_cnt_ref, q_ref, k_ref, v_ref,
                       segq_ref, segk_ref, o_ref, m_sc, l_sc, acc_sc):
    qi = pl.program_id(1)
    ki = pl.program_id(2)

    @pl.when(ki == 0)
    def _():
        m_sc[...] = jnp.full_like(m_sc, -1e30)
        l_sc[...] = jnp.zeros_like(l_sc)
        acc_sc[...] = jnp.zeros_like(acc_sc)

    @pl.when(ki < kv_cnt_ref[qi])
    def _():
        q = q_ref[0]                                   # (tq, D) bf16, pre-RoPE'd
        k = k_ref[0]                                   # (tk, D) bf16
        s = lax.dot_general(q, k, (((1,), (1,)), ((), ())),
                            preferred_element_type=jnp.float32)   # (tq, tk)
        mask = segq_ref[...] == segk_ref[...]          # block-diagonal segments
        s = jnp.where(mask, s, -1e30)

        m_prev = m_sc[...]
        m_cur = jnp.maximum(m_prev, jnp.max(s, axis=-1, keepdims=True))
        alpha = jnp.exp(m_prev - m_cur)
        p = jnp.where(mask, jnp.exp(s - m_cur), 0.0)
        l_sc[...] = alpha * l_sc[...] + jnp.sum(p, axis=-1, keepdims=True)
        acc_sc[...] = alpha * acc_sc[...] + jnp.dot(
            p.astype(jnp.bfloat16), v_ref[0], preferred_element_type=jnp.float32)
        m_sc[...] = m_cur

    @pl.when(ki == pl.num_programs(2) - 1)
    def _():
        # padded (fully masked) query rows have l == 0
        inv = pl.reciprocal(jnp.maximum(l_sc[...], 1e-20), approx=True)
        o_ref[0] = (acc_sc[...] * inv).astype(o_ref.dtype)


def flash_attention(q, k, v, seg_q, seg_k, kv_lo_np, kv_cnt_np, *, bt=128):
    """q,k,v: (H, Sp, D) bf16 (q pre-scaled & RoPE'd).  seg_q:(Sp,1) f32,
    seg_k:(1,Sp) f32.  kv_lo/kv_cnt: per-q-tile KV block ranges (numpy int32,
    scalar-prefetched).  Returns (H, Sp, D) bf16."""
    H, Sp, D = q.shape
    nq = Sp // bt
    max_cnt = int(np.max(kv_cnt_np))
    kv_lo = jnp.asarray(kv_lo_np, jnp.int32)
    kv_cnt = jnp.asarray(kv_cnt_np, jnp.int32)

    def q_map(h, qi, ki, lo, cnt):
        return (h, qi, 0)

    def kv_map(h, qi, ki, lo, cnt):
        return (h, lo[qi] + jnp.minimum(ki, cnt[qi] - 1), 0)

    def sq_map(h, qi, ki, lo, cnt):
        return (qi, 0)

    def sk_map(h, qi, ki, lo, cnt):
        return (0, lo[qi] + jnp.minimum(ki, cnt[qi] - 1))

    grid_spec = pltpu.PrefetchScalarGridSpec(
        num_scalar_prefetch=2,
        grid=(H, nq, max_cnt),
        in_specs=[pl.BlockSpec((1, bt, D), q_map),
                  pl.BlockSpec((1, bt, D), kv_map),
                  pl.BlockSpec((1, bt, D), kv_map),
                  pl.BlockSpec((bt, 1), sq_map),
                  pl.BlockSpec((1, bt), sk_map)],
        out_specs=pl.BlockSpec((1, bt, D), q_map),
        scratch_shapes=[pltpu.VMEM((bt, 1), jnp.float32),
                        pltpu.VMEM((bt, 1), jnp.float32),
                        pltpu.VMEM((bt, D), jnp.float32)])

    return pl.pallas_call(
        _flash_attn_kernel,
        grid_spec=grid_spec,
        out_shape=jax.ShapeDtypeStruct((H, Sp, D), jnp.bfloat16),
        compiler_params=pltpu.CompilerParams(
            dimension_semantics=("parallel", "parallel", "arbitrary")),
    )(kv_lo, kv_cnt, q, k, v, seg_q, seg_k)


def kv_ranges(token_seg, seqlens, L, Sp, bt):
    """Per-q-tile contiguous KV block range covering every segment that has at
    least one real token in the q tile."""
    nq = Sp // bt
    ends = np.cumsum(seqlens)
    starts = ends - seqlens
    lo = np.zeros(nq, np.int32)
    cnt = np.ones(nq, np.int32)
    for qi in range(nq):
        t0 = qi * bt
        t1 = min((qi + 1) * bt, L)
        if t0 >= L:
            continue                       # fully padded q tile
        s0 = int(token_seg[t0])
        s1 = int(token_seg[t1 - 1])
        blo = int(starts[s0]) // bt
        bhi = (int(ends[s1]) - 1) // bt
        lo[qi] = blo
        cnt[qi] = bhi - blo + 1
    return lo, cnt


# ----------------------------- plain-JAX glue --------------------------------

def compute_pos_ids(grid_thw, sms):
    out = []
    for t, h, w in grid_thw:
        t, h, w = int(t), int(h), int(w)
        hpos = np.repeat(np.arange(h)[:, None], w, axis=1)
        wpos = np.repeat(np.arange(w)[None, :], h, axis=0)
        hpos = hpos.reshape(h // sms, sms, w // sms, sms).transpose(0, 2, 1, 3).reshape(-1)
        wpos = wpos.reshape(h // sms, sms, w // sms, sms).transpose(0, 2, 1, 3).reshape(-1)
        p = np.stack([hpos, wpos], axis=-1)
        out.append(np.tile(p, (t, 1)))
    return np.concatenate(out, axis=0)


def _cc1(t, A=-0.75):
    return ((A + 2.0) * t - (A + 3.0)) * t * t + 1.0


def _cc2(t, A=-0.75):
    return ((A * t - 5.0 * A) * t + 8.0 * A) * t - 4.0 * A


def grid_sample_bicubic_border(img, gx, gy):
    """torch.F.grid_sample(mode='bicubic', align_corners=False, padding='border')."""
    C, Hin, Win = img.shape
    ix = ((gx + 1.0) * Win - 1.0) / 2.0
    iy = ((gy + 1.0) * Hin - 1.0) / 2.0
    ix0 = jnp.floor(ix)
    iy0 = jnp.floor(iy)
    tx = ix - ix0
    ty = iy - iy0
    wx = [_cc2(tx + 1.0), _cc1(tx), _cc1(1.0 - tx), _cc2(2.0 - tx)]
    wy = [_cc2(ty + 1.0), _cc1(ty), _cc1(1.0 - ty), _cc2(2.0 - ty)]
    out = jnp.zeros((C, gx.shape[0]), jnp.float32)
    for i in range(4):
        ys = jnp.clip(iy0 - 1.0 + i, 0.0, Hin - 1.0).astype(jnp.int32)
        for j in range(4):
            xs = jnp.clip(ix0 - 1.0 + j, 0.0, Win - 1.0).astype(jnp.int32)
            vals = img[:, ys, xs]
            out = out + vals * (wy[i] * wx[j])[None, :]
    return out


def adapted_pos_embed(pos_embed, grid_thw, seqlens, pos_ids):
    # TODO(synk): the bicubic grid-sample is gather-heavy; kept in XLA.
    num_pos, hid = pos_embed.shape
    orig = int(round(num_pos ** 0.5))
    img = pos_embed.reshape(orig, orig, hid).transpose(2, 0, 1).astype(jnp.float32)
    target_h = np.concatenate(
        [np.full(int(l), float(grid_thw[i, 1]), np.float32) for i, l in enumerate(seqlens)])
    target_w = np.concatenate(
        [np.full(int(l), float(grid_thw[i, 2]), np.float32) for i, l in enumerate(seqlens)])
    h_coords = pos_ids[:, 0].astype(np.float32)
    w_coords = pos_ids[:, 1].astype(np.float32)
    norm_w = (w_coords + 0.5) / target_w * 2.0 - 1.0
    norm_h = (h_coords + 0.5) / target_h * 2.0 - 1.0
    sampled = grid_sample_bicubic_border(img, jnp.asarray(norm_w), jnp.asarray(norm_h))
    return sampled.T


# ----------------------------- model definition ------------------------------

class Config:
    hidden_size = 32
    num_heads = 4
    depth = 2
    patch_size = 2
    temporal_patch_size = 1
    in_channels = 3
    spatial_merge_size = 2
    out_hidden_size = 48
    intermediate_size = 64
    image_size = 8
    rms_norm_eps = 1e-6
    norm_eps = 1e-6

    @property
    def num_positions(self):
        return (self.image_size // self.patch_size) ** 2


def init_params(key, cfg):
    def take(shape, scale=0.02):
        nonlocal key
        key, sub = jax.random.split(key)
        return scale * jax.random.normal(sub, shape, jnp.float32)

    hid = cfg.hidden_size
    kdim = cfg.in_channels * cfg.temporal_patch_size * cfg.patch_size ** 2
    mh = cfg.out_hidden_size        # GLM-4V vision MLP hidden == out_hidden_size
    p = {}
    p["patch_embed_w"] = take((kdim, hid))     # Conv3d(kernel==stride) folded
    p["patch_embed_b"] = take((hid,))
    p["post_conv_ln_w"] = jnp.ones((hid,), jnp.float32)
    p["pos_embed"] = take((cfg.num_positions, hid), scale=1.0)

    blocks = []
    for _ in range(cfg.depth):
        blocks.append({
            "norm1_w": jnp.ones((hid,), jnp.float32),
            "norm2_w": jnp.ones((hid,), jnp.float32),
            "qkv_w": take((hid, 3 * hid)),
            "proj_w": take((hid, hid)),
            "gate_w": take((hid, mh)),
            "up_w": take((hid, mh)),
            "down_w": take((mh, hid)),
        })
    p["blocks"] = blocks
    p["post_ln_w"] = jnp.ones((hid,), jnp.float32)

    # Conv2d(kernel==stride==sms) folded to dense (sms*sms*hid, out_hid)
    sms = cfg.spatial_merge_size
    conv_w = take((cfg.out_hidden_size, hid, sms, sms))
    p["downsample_w"] = conv_w.transpose(2, 3, 1, 0).reshape(
        sms * sms * hid, cfg.out_hidden_size)
    p["downsample_b"] = take((cfg.out_hidden_size,))

    p["merger"] = {
        "proj_w": take((cfg.out_hidden_size, cfg.out_hidden_size)),
        "ln_w": jnp.ones((cfg.out_hidden_size,), jnp.float32),
        "ln_b": jnp.zeros((cfg.out_hidden_size,), jnp.float32),
        "gate_w": take((cfg.out_hidden_size, cfg.intermediate_size)),
        "up_w": take((cfg.out_hidden_size, cfg.intermediate_size)),
        "down_w": take((cfg.intermediate_size, cfg.out_hidden_size)),
    }
    return p, key


def prepare_params(p, cfg):
    """Pad every weight to lane-dense (x128) shapes and cast to bf16 ONCE."""
    hid = cfg.hidden_size
    kdim = cfg.in_channels * cfg.temporal_patch_size * cfg.patch_size ** 2
    sms = cfg.spatial_merge_size
    dims = dict(
        HIDP=_ru(hid, 128),
        KDIMP=_ru(kdim, 128),
        QKVP=_ru(3 * hid, 128),
        MHP=_ru(cfg.out_hidden_size, 128),
        OUTP=_ru(cfg.out_hidden_size, 128),
        INTP=_ru(cfg.intermediate_size, 128),
        DSKP=_ru(sms * sms * hid, 128),
    )

    def w(a, kp, np_):
        return _pad2(a, kp, np_).astype(jnp.bfloat16)

    def vrow(a, np_):
        return _pad2(a.reshape(1, -1), 1, np_).astype(jnp.float32)

    prep = {
        "dims": dims,
        "patch_w": w(p["patch_embed_w"], dims["KDIMP"], dims["HIDP"]),
        "patch_b": vrow(p["patch_embed_b"], dims["HIDP"]),
        "post_conv_ln_w": vrow(p["post_conv_ln_w"], dims["HIDP"]),
        "pos_embed": p["pos_embed"],
        "post_ln_w": vrow(p["post_ln_w"], dims["HIDP"]),
        "downsample_w": w(p["downsample_w"], dims["DSKP"], dims["OUTP"]),
        "downsample_b": vrow(p["downsample_b"], dims["OUTP"]),
    }
    prep["blocks"] = [{
        "norm1_w": vrow(b["norm1_w"], dims["HIDP"]),
        "norm2_w": vrow(b["norm2_w"], dims["HIDP"]),
        "qkv_w": w(b["qkv_w"], dims["HIDP"], dims["QKVP"]),
        "proj_w": w(b["proj_w"], hid, dims["HIDP"]),
        "gate_w": w(b["gate_w"], dims["HIDP"], dims["MHP"]),
        "up_w": w(b["up_w"], dims["HIDP"], dims["MHP"]),
        "down_w": w(b["down_w"], dims["MHP"], dims["HIDP"]),
    } for b in p["blocks"]]
    m = p["merger"]
    prep["merger"] = {
        "proj_w": w(m["proj_w"], dims["OUTP"], dims["OUTP"]),
        "ln_w": vrow(m["ln_w"], dims["OUTP"]),
        "ln_b": vrow(m["ln_b"], dims["OUTP"]),
        "gate_w": w(m["gate_w"], dims["OUTP"], dims["INTP"]),
        "up_w": w(m["up_w"], dims["OUTP"], dims["INTP"]),
        "down_w": w(m["down_w"], dims["INTP"], dims["OUTP"]),
    }
    return prep


def glm4v_vision_forward(prep, x_raw, grid_thw, cfg):
    grid_thw = np.asarray(grid_thw)
    L = x_raw.shape[0]
    hid, H = cfg.hidden_size, cfg.num_heads
    D = hid // H
    scale = 1.0 / math.sqrt(D)
    sms = cfg.spatial_merge_size
    d = prep["dims"]
    BT = 128                                   # token tile (matmul M & attention)
    Sp = _ru(L, BT)

    # ---- host-side static metadata (numpy) ----
    pos_ids = compute_pos_ids(grid_thw, sms)                      # (L, 2)
    max_grid = int(grid_thw[:, 1:].max())
    rot_dim = D // 2
    inv_freq = 1.0 / (10000.0 ** (np.arange(0, rot_dim, 2, dtype=np.float32) / rot_dim))
    freqs_full = np.outer(np.arange(max_grid, dtype=np.float32), inv_freq)
    rotary = freqs_full[pos_ids].reshape(L, -1)                   # (L, D//2)
    cos_np = np.concatenate([np.cos(rotary)] * 2, -1)             # (L, D)
    sin_np = np.concatenate([np.sin(rotary)] * 2, -1)
    cosf = jnp.asarray(np.pad(cos_np, ((0, Sp - L), (0, 0))), jnp.float32)
    sinf = jnp.asarray(np.pad(sin_np, ((0, Sp - L), (0, 0))), jnp.float32)

    seqlens = np.repeat(grid_thw[:, 1] * grid_thw[:, 2], grid_thw[:, 0]).astype(np.int64)
    token_seg = np.repeat(np.arange(len(seqlens)), seqlens)
    # distinct pad sentinels so padded q never matches padded k
    seg_q = jnp.asarray(np.pad(token_seg.astype(np.float32), (0, Sp - L),
                               constant_values=-1.0).reshape(Sp, 1))
    seg_k = jnp.asarray(np.pad(token_seg.astype(np.float32), (0, Sp - L),
                               constant_values=-2.0).reshape(1, Sp))
    kv_lo_np, kv_cnt_np = kv_ranges(token_seg, seqlens, L, Sp, BT)

    hd = D // 2
    rot_np = np.zeros((D, D), np.float32)
    rot_np[hd:, :hd] = -np.eye(hd, dtype=np.float32)
    rot_np[:hd, hd:] = np.eye(hd, dtype=np.float32)
    rot_m = jnp.asarray(rot_np, jnp.bfloat16)

    # ---- patch embed (Conv3d folded to matmul, bias fused) ----
    xin = jnp.pad(x_raw, ((0, Sp - L), (0, d["KDIMP"] - x_raw.shape[1]))
                  ).astype(jnp.bfloat16)
    x = matmul(xin, prep["patch_w"], bias=prep["patch_b"])        # (Sp, HIDP) bf16

    # ---- post-conv RMSNorm fused with adaptive (bicubic) pos-embed add ----
    pos = adapted_pos_embed(prep["pos_embed"], grid_thw, seqlens, pos_ids)  # (L, hid) f32
    pos = jnp.pad(pos, ((0, Sp - L), (0, d["HIDP"] - hid)))
    x = rmsnorm(x, prep["post_conv_ln_w"], norm_dim=hid,
                eps=cfg.rms_norm_eps, add=pos)

    # ---- transformer blocks ----
    for blk in prep["blocks"]:
        # RMSNorm fused into the QKV matmul prologue (inv-rms computed in-kernel)
        qkv = matmul(x, blk["qkv_w"], prologue="rms", gamma=blk["norm1_w"],
                     norm_dim=hid, eps=cfg.norm_eps)              # (Sp, QKVP) bf16
        q = qkv[:, 0:hid].reshape(Sp, H, D).transpose(1, 0, 2)
        k = qkv[:, hid:2 * hid].reshape(Sp, H, D).transpose(1, 0, 2)
        v = qkv[:, 2 * hid:3 * hid].reshape(Sp, H, D).transpose(1, 0, 2)
        q, k = apply_rope(q, k, cosf, sinf, rot_m, scale, bt=BT)  # RoPE once
        ctx = flash_attention(q, k, v, seg_q, seg_k, kv_lo_np, kv_cnt_np,
                              bt=BT)                              # (H, Sp, D) bf16
        ctx = ctx.transpose(1, 0, 2).reshape(Sp, hid)
        x = matmul(ctx, blk["proj_w"], residual=x)                # proj + residual

        # MLP: RMSNorm + gate_up + SiLU*up fused; down + residual fused
        act = matmul(x, blk["gate_w"], blk["up_w"], prologue="rms",
                     gamma=blk["norm2_w"], norm_dim=hid, eps=cfg.norm_eps)
        x = matmul(act, blk["down_w"], residual=x)

    # ---- post layernorm + downsample (Conv2d folded to matmul) ----
    x = rmsnorm(x, prep["post_ln_w"], norm_dim=hid, eps=cfg.rms_norm_eps)
    xg = x[:L, :hid].reshape(-1, sms * sms * hid)
    if xg.shape[1] != d["DSKP"]:
        xg = jnp.pad(xg, ((0, 0), (0, d["DSKP"] - xg.shape[1])))
    x = matmul(xg, prep["downsample_w"], bias=prep["downsample_b"])

    # ---- patch merger ----
    m = prep["merger"]
    x = matmul(x, m["proj_w"])
    # LayerNorm + exact GELU fused into the gate_up matmul prologue,
    # SiLU-and-mul fused in the epilogue.
    x = matmul(x, m["gate_w"], m["up_w"], prologue="ln_gelu",
               gamma=m["ln_w"], beta=m["ln_b"],
               norm_dim=cfg.out_hidden_size, eps=1e-5)
    x = matmul(x, m["down_w"], out_dtype=jnp.float32)
    return x[:, :cfg.out_hidden_size]


# ----------------------------------- main ------------------------------------

if __name__ == "__main__":
    cfg = Config()
    key = jax.random.PRNGKey(0)
    params, key = init_params(key, cfg)
    prep = prepare_params(params, cfg)

    # two images: 1x16x16 and 1x8x8 patch grids -> 320 tokens total
    # (exercises multi-tile matmul M axis, the prefetched KV-range attention
    #  path and the segment-ID masking across image boundaries)
    grid_thw = np.array([[1, 16, 16], [1, 8, 8]], dtype=np.int64)
    L = int((grid_thw[:, 0] * grid_thw[:, 1] * grid_thw[:, 2]).sum())
    kdim = cfg.in_channels * cfg.temporal_patch_size * cfg.patch_size ** 2

    key, sub = jax.random.split(key)
    x = jax.random.normal(sub, (L, kdim), jnp.float32)

    out = glm4v_vision_forward(prep, x, grid_thw, cfg)
    out = jax.block_until_ready(out)
    assert out.shape == (L // (cfg.spatial_merge_size ** 2), cfg.out_hidden_size)
    assert bool(jnp.all(jnp.isfinite(out)))
    print("KERNEL_OK")
</pallas_src>

<mosaic_0001>
module attributes {stable_mosaic.version = 11 : i64} {
  func.func @_matmul_kernel(%arg0: i32, %arg1: i32, %arg2: i32, %arg3: memref<128x128xbf16, #tpu.memory_space<vmem>>, %arg4: memref<128x128xbf16, #tpu.memory_space<vmem>>, %arg5: memref<1x128xf32, #tpu.memory_space<vmem>>, %arg6: memref<128x128xbf16, #tpu.memory_space<vmem>>, %arg7: memref<128x128xf32, #tpu.memory_space<vmem>>) attributes {dimension_semantics = [#tpu.dimension_semantics<parallel>, #tpu.dimension_semantics<parallel>, #tpu.dimension_semantics<arbitrary>], iteration_bounds = array<i64: 3, 1, 1>, scalar_prefetch = 0 : i64, scratch_operands = 1 : i64, tpu.core_type = #tpu.core_type<tc>, window_params = [{transform_indices = @transform_0, window_bounds = array<i64: 128, 128>}, {transform_indices = @transform_1, window_bounds = array<i64: 128, 128>}, {transform_indices = @transform_2, window_bounds = array<i64: 1, 128>}, {transform_indices = @transform_3, window_bounds = array<i64: 128, 128>}]} {
    %c0_i32 = arith.constant 0 : i32
    %0 = arith.cmpi eq, %arg2, %c0_i32 : i32
    %1 = arith.extui %0 : i1 to i32
    %c0_i32_0 = arith.constant 0 : i32
    %2 = arith.cmpi ne, %1, %c0_i32_0 : i32
    scf.if %2 {
      %cst_10 = arith.constant 0.000000e+00 : f32
      %12 = vector.broadcast %cst_10 : f32 to vector<128x128xf32>
      %c0_11 = arith.constant 0 : index
      %c0_12 = arith.constant 0 : index
      %13 = vector.load %arg7[%c0_11, %c0_12] : memref<128x128xf32, #tpu.memory_space<vmem>>, vector<128x128xf32>
      tpu.vector_store %arg7[%c0_11, %c0_12], %12 {strides = array<i32>} : memref<128x128xf32, #tpu.memory_space<vmem>>, vector<128x128xf32>,
    } else {
    }
    %c0 = arith.constant 0 : index
    %c0_1 = arith.constant 0 : index
    %3 = vector.load %arg3[%c0, %c0_1] : memref<128x128xbf16, #tpu.memory_space<vmem>>, vector<128x128xbf16>
    %c0_2 = arith.constant 0 : index
    %c0_3 = arith.constant 0 : index
    %4 = vector.load %arg7[%c0_2, %c0_3] : memref<128x128xf32, #tpu.memory_space<vmem>>, vector<128x128xf32>
    %c0_4 = arith.constant 0 : index
    %c0_5 = arith.constant 0 : index
    %5 = vector.load %arg4[%c0_4, %c0_5] : memref<128x128xbf16, #tpu.memory_space<vmem>>, vector<128x128xbf16>
    %cst = arith.constant dense<0.000000e+00> : vector<128x128xf32>
    %6 = tpu.matmul %3, %5, %cst {dimension_numbers = #tpu.dot_dimension_numbers<[1], [0], [0], [1], [0, 0, 1, 1], [], []>} : vector<128x128xbf16>, vector<128x128xbf16>, vector<128x128xf32> -> vector<128x128xf32>
    %7 = arith.addf %4, %6 : vector<128x128xf32>
    %c0_6 = arith.constant 0 : index
    %c0_7 = arith.constant 0 : index
    %8 = vector.load %arg7[%c0_6, %c0_7] : memref<128x128xf32, #tpu.memory_space<vmem>>, vector<128x128xf32>
    tpu.vector_store %arg7[%c0_6, %c0_7], %7 {strides = array<i32>} : memref<128x128xf32, #tpu.memory_space<vmem>>, vector<128x128xf32>,
    %c0_i32_8 = arith.constant 0 : i32
    %9 = arith.cmpi eq, %arg2, %c0_i32_8 : i32
    %10 = arith.extui %9 : i1 to i32
    %c0_i32_9 = arith.constant 0 : i32
    %11 = arith.cmpi ne, %10, %c0_i32_9 : i32
    scf.if %11 {
      %c0_10 = arith.constant 0 : index
      %c0_11 = arith.constant 0 : index
      %12 = vector.load %arg7[%c0_10, %c0_11] : memref<128x128xf32, #tpu.memory_space<vmem>>, vector<128x128xf32>
      %c0_12 = arith.constant 0 : index
      %c0_13 = arith.constant 0 : index
      %13 = vector.load %arg5[%c0_12, %c0_13] : memref<1x128xf32, #tpu.memory_space<vmem>>, vector<1x128xf32>
      %14 = vector.broadcast %13 : vector<1x128xf32> to vector<128x128xf32>
      %15 = arith.addf %12, %14 : vector<128x128xf32>
      %16 = arith.truncf %15 : vector<128x128xf32> to vector<128x128xbf16>
      %c0_14 = arith.constant 0 : index
      %c0_15 = arith.constant 0 : index
      %17 = vector.load %arg6[%c0_14, %c0_15] : memref<128x128xbf16, #tpu.memory_space<vmem>>, vector<128x128xbf16>
      tpu.vector_store %arg6[%c0_14, %c0_15], %16 {strides = array<i32>} : memref<128x128xbf16, #tpu.memory_space<vmem>>, vector<128x128xbf16>,
    } else {
    }
    return
  }
  func.func @transform_0(%arg0: i32, %arg1: i32, %arg2: i32) -> (i32, i32) {
    %c0_i32 = arith.constant 0 : i32
    return %arg0, %arg2 : i32, i32
  }
  func.func @transform_1(%arg0: i32, %arg1: i32, %arg2: i32) -> (i32, i32) {
    %c0_i32 = arith.constant 0 : i32
    return %arg2, %arg1 : i32, i32
  }
  func.func @transform_2(%arg0: i32, %arg1: i32, %arg2: i32) -> (i32, i32) {
    %c0_i32 = arith.constant 0 : i32
    %c0_i32_0 = arith.constant 0 : i32
    return %c0_i32, %arg1 : i32, i32
  }
  func.func @transform_3(%arg0: i32, %arg1: i32, %arg2: i32) -> (i32, i32) {
    %c0_i32 = arith.constant 0 : i32
    return %arg0, %arg1 : i32, i32
  }
}

</mosaic_0001>

<llo_original>
// kernel: tpu_custom_call.1
$region0: #{tpu_custom_call.1}
  #allocation0 [shape = 'u32[]', space=smem, size = 0x4, offset = 0x4, fixed_abs, tag = 'smem constant byte address 0x4 - core index']
  #allocation1 [shape = 'u32[144,128]{1,0:T(1,128)}', space=vmem, size = 0x12000, scoped, tag = 'internal scratch']
  #allocation2 [shape = 'f32[128,128]{1,0:T(8,128)}', space=vmem, size = 0x10000, scoped, tag = 'scratch operand']
  %s0 = inlined_call_operand.hbm [shape: bf16[384,128], index: 0, kind: input, shape index: {}]
  %s1 = inlined_call_operand.hbm [shape: bf16[128,128], index: 1, kind: input, shape index: {}]
  %s2 = inlined_call_operand.vmem [shape: f32[1,128], index: 2, kind: input, shape index: {}]
  %s3 = inlined_call_operand.hbm [shape: bf16[384,128], index: 3, kind: output, shape index: {}]
  %s4 = sld [smem:[#allocation0]]
  $region61: #{tpu_custom_call.1} parent=0
    _
  %s6 = ssub.s32 1, %s4
  %s7 = scalar_select 0, %s6, %s4
  $region1: #{tpu_custom_call.1} parent=0
    #allocation3 [shape = 'u8[65536]{0}', space=vmem, size = 0x10000, scoped, tag = 'input window, operand 0']
    #allocation4 [shape = 's32[2]{0}', space=sflag, size = 0x8, scoped, tag = 'scoped memory for tpu_custom_call.1']
    #allocation5 [shape = 's32[2]{0}', space=sflag, size = 0x8, scoped, tag = 'scoped memory for tpu_custom_call.1']
    #allocation6 [shape = 'u8[32768]{0}', space=vmem, size = 0x8000, scoped, tag = 'input window, operand 1, single buffered']
    #allocation7 [shape = 's32[1]{0}', space=sflag, size = 0x4, scoped, tag = 'scoped memory for tpu_custom_call.1']
    #allocation8 [shape = 'u8[65536]{0}', space=vmem, size = 0x10000, scoped, tag = 'output window, operand 0']
    %8 = vsyncpa [#allocation4], 0
    %s9 = scalar_lea.sflag [#allocation4], 1
    %10 = vsyncpa %s9, 0
    %11 = vsyncpa [#allocation7], 0
    %12 = vsyncpa [#allocation5], 0
    %s13 = scalar_lea.sflag [#allocation5], 1
    %14 = vsyncpa %s13, 0
    loop: start=0, step=1, limit=5
    $region2: #{tpu_custom_call.1} parent=1 // loop_pre_header
      _
    $region3: #{tpu_custom_call.1} parent=1 // loop_header
      %s16 = sphi 0, %s20
      %p17 = scmp.ge.s32.totalorder %s16, 5
      %s23 = sphi 0, %s42
      %s24 = sphi 0, %s38
      %s25 = sphi 0, %s34
      %s26 = sphi 0, %s23
      %s27 = sphi 0, %s24
      %s28 = sphi 0, %s25
      %s29 = sphi 0, %s26
      %s30 = sphi 0, %s27
      %s31 = sphi 0, %s28
      %s47 = sphi 0, %s49
      %s50 = sphi 0, %s47
      %s51 = sphi 0, %s50
      %s67 = sphi 0, %s51
      %s75 = sphi 0, %s77
      %s78 = sphi 0, %s75
      %s79 = sphi 0, %s78
      %s95 = sphi 0, %s79
      %s101 = sphi 0, %s103
      %s104 = sphi 0, %s101
      %s105 = sphi 0, %s104
      %s121 = sphi 0, %s105
      %s129 = sphi 0, %s131
      %s132 = sphi 0, %s129
      %s133 = sphi 0, %s132
      %s149 = sphi 0, %s133
    $region4: #{tpu_custom_call.1} parent=1 // loop_header_branch
      %19 = sbr.rel (%p17) target = $region8
    $region5: #{tpu_custom_call.1} parent=1 // loop_body
      %s21 = ssub.s32 %s16, 1
      %s22 = ssub.s32 %s16, 2
      %s32 = sadd.s32 1, %s25
      %p33 = scmp.ge.s32.totalorder %s32, 1
      %s34 = scalar_select %p33, 0, %s32
      %s35 = sadd.s32 1, %s24
      %s36 = scalar_select %p33, %s35, %s24
      %p37 = scmp.ge.s32.totalorder %s36, 1
      %s38 = scalar_select %p37, 0, %s36
      %s39 = sadd.s32 1, %s23
      %s40 = scalar_select %p37, %s39, %s23
      %p41 = scmp.ge.s32.totalorder %s40, 3
      %s42 = scalar_select %p41, 0, %s40
      %s43 = ssub.s32 %s23, %s42
      %s44 = ssub.s32 %s25, %s34
      %s45 = sor.u32 %s43, %s44
      %p46 = scmp.eq.s32.totalorder %s45, 0
      %s48 = sadd.s32 %s47, 1
      %s49 = scalar_select %p46, %s47, %s48
      %p52 = pneg %p46
      %p53 = scmp.eq.s32.totalorder %s16, 2
      %p54 = por %p52, %p53
      %p55 = scmp.ne.s32.totalorder %s47, %s50
      %p56 = scmp.eq.s32.totalorder %s16, 0
      %p57 = por %p55, %p56
      %p58 = scmp.ne.s32.totalorder %s47, %s50
      %p59 = scmp.eq.s32.totalorder %s21, 2
      %p60 = por %p58, %p59
      %p61 = scmp.ne.s32.totalorder %s50, %s51
      %p62 = scmp.eq.s32.totalorder %s21, 0
      %p63 = por %p61, %p62
      %p64 = scmp.ne.s32.totalorder %s50, %s51
      %p65 = scmp.eq.s32.totalorder %s22, 2
      %p66 = por %p64, %p65
      %p68 = scmp.ne.s32.totalorder %s51, %s67
      %p69 = scmp.eq.s32.totalorder %s22, 0
      %p70 = por %p68, %p69
      %s71 = ssub.s32 %s25, %s34
      %s72 = ssub.s32 %s24, %s38
      %s73 = sor.u32 %s71, %s72
      %p74 = scmp.eq.s32.totalorder %s73, 0
      %s76 = sadd.s32 %s75, 1
      %s77 = scalar_select %p74, %s75, %s76
      %p80 = pneg %p74
      %p81 = scmp.eq.s32.totalorder %s16, 2
      %p82 = por %p80, %p81
      %p83 = scmp.ne.s32.totalorder %s75, %s78
      %p84 = scmp.eq.s32.totalorder %s16, 0
      %p85 = por %p83, %p84
      %p86 = scmp.ne.s32.totalorder %s75, %s78
      %p87 = scmp.eq.s32.totalorder %s21, 2
      %p88 = por %p86, %p87
      %p89 = scmp.ne.s32.totalorder %s78, %s79
      %p90 = scmp.eq.s32.totalorder %s21, 0
      %p91 = por %p89, %p90
      %p92 = scmp.ne.s32.totalorder %s78, %s79
      %p93 = scmp.eq.s32.totalorder %s22, 2
      %p94 = por %p92, %p93
      %p96 = scmp.ne.s32.totalorder %s79, %s95
      %p97 = scmp.eq.s32.totalorder %s22, 0
      %p98 = por %p96, %p97
      %s99 = ssub.s32 %s24, %s38
      %p100 = scmp.eq.s32.totalorder %s99, 0
      %s102 = sadd.s32 %s101, 1
      %s103 = scalar_select %p100, %s101, %s102
      %p106 = pneg %p100
      %p107 = scmp.eq.s32.totalorder %s16, 2
      %p108 = por %p106, %p107
      %p109 = scmp.ne.s32.totalorder %s101, %s104
      %p110 = scmp.eq.s32.totalorder %s16, 0
      %p111 = por %p109, %p110
      %p112 = scmp.ne.s32.totalorder %s101, %s104
      %p113 = scmp.eq.s32.totalorder %s21, 2
      %p114 = por %p112, %p113
      %p115 = scmp.ne.s32.totalorder %s104, %s105
      %p116 = scmp.eq.s32.totalorder %s21, 0
      %p117 = por %p115, %p116
      %p118 = scmp.ne.s32.totalorder %s104, %s105
      %p119 = scmp.eq.s32.totalorder %s22, 2
      %p120 = por %p118, %p119
      %p122 = scmp.ne.s32.totalorder %s105, %s121
      %p123 = scmp.eq.s32.totalorder %s22, 0
      %p124 = por %p122, %p123
      %s125 = ssub.s32 %s23, %s42
      %s126 = ssub.s32 %s24, %s38
      %s127 = sor.u32 %s125, %s126
      %p128 = scmp.eq.s32.totalorder %s127, 0
      %s130 = sadd.s32 %s129, 1
      %s131 = scalar_select %p128, %s129, %s130
      %p134 = pneg %p128
      %p135 = scmp.eq.s32.totalorder %s16, 2
      %p136 = por %p134, %p135
      %p137 = scmp.ne.s32.totalorder %s129, %s132
      %p138 = scmp.eq.s32.totalorder %s16, 0
      %p139 = por %p137, %p138
      %p140 = scmp.ne.s32.totalorder %s129, %s132
      %p141 = scmp.eq.s32.totalorder %s21, 2
      %p142 = por %p140, %p141
      %p143 = scmp.ne.s32.totalorder %s132, %s133
      %p144 = scmp.eq.s32.totalorder %s21, 0
      %p145 = por %p143, %p144
      %p146 = scmp.ne.s32.totalorder %s132, %s133
      %p147 = scmp.eq.s32.totalorder %s22, 2
      %p148 = por %p146, %p147
      %p150 = scmp.ne.s32.totalorder %s133, %s149
      %p151 = scmp.eq.s32.totalorder %s22, 0
      %p152 = por %p150, %p151
      %p153 = scmp.le.s32.totalorder 1, %s16
      %p154 = scmp.lt.s32.totalorder %s16, 4
      %p155 = pnand %p153, %p154
      %p156 = pneg %p155
      // Predicated region
      $region9: #{tpu_custom_call.1} parent=5 // pred_check
        _
      $region10: #{tpu_custom_call.1} parent=5 // pred_check_branch
        %158 = sbr.rel (%p155) target = $region12
      $region11: #{tpu_custom_call.1} parent=5 // pred_region
        %s159 = ssub.s32 %s16, 1
        // Predicated region
        $region13: #{tpu_custom_call.1} parent=11 // pred_check
          %p160 = pneg %p91
        $region14: #{tpu_custom_call.1} parent=11 // pred_check_branch
          %162 = sbr.rel (%p160) target = $region16
        $region15: #{tpu_custom_call.1} parent=11 // pred_region
          %s163 = smul.u32 16, %s28
          %s165 = ssub.s32 1024, 1024
          %166 = vsyncadd [#allocation7], %s165
          %s167 = sadd.s32 %s27, %s163
          %s168 = smul.addr %s167, 64
          %s169 = scalar_lea.hbm %s1, %s168
          %s170 = sshll.u32 [#allocation6], 4
          %s171 = int_to_ptr.vmem [resolvable:$true] %s170
          %176 = dma.hbm_to_vmem [thread:$0]  %s169, 1024, %s171, [#allocation7], 64, 64, 4
        $region16: #{tpu_custom_call.1} parent=11 // pred_fallthru
          _
        // Predicated region
        $region17: #{tpu_custom_call.1} parent=11 // pred_check
          %p177 = pneg %p117
        $region18: #{tpu_custom_call.1} parent=11 // pred_check_branch
          %179 = sbr.rel (%p177) target = $region20
        $region19: #{tpu_custom_call.1} parent=11 // pred_region
          %p180 = scmp.lt.s32.totalorder %s27, 0
          %s181 = scalar_select %p180, %s27, 0
          %s182 = scalar_lea.vmem %s2, %s181
        $region20: #{tpu_custom_call.1} parent=11 // pred_fallthru
          _
      $region12: #{tpu_custom_call.1} parent=5 // pred_fallthru
        _
      %p183 = scmp.lt.s32.totalorder %s16, 3
      // Predicated region
      $region21: #{tpu_custom_call.1} parent=5 // pred_check
        %p184 = pneg %p183
      $region22: #{tpu_custom_call.1} parent=5 // pred_check_branch
        %186 = sbr.rel (%p184) target = $region24
      $region23: #{tpu_custom_call.1} parent=5 // pred_region
        // Predicated region
        $region25: #{tpu_custom_call.1} parent=23 // pred_check
          %p187 = pneg %p57
        $region26: #{tpu_custom_call.1} parent=23 // pred_check_branch
          %189 = sbr.rel (%p187) target = $region28
        $region27: #{tpu_custom_call.1} parent=23 // pred_region
          %s190 = sand.u32 %s47, 1
          %s191 = scalar_lea.sflag [#allocation4], %s190
          %s192 = sand.u32 %s47, 1
          %s193 = smul.addr %s192, 64
          %s194 = scalar_lea.vmem [#allocation3], %s193
          %s195 = smul.u32 16, %s23
          %s197 = ssub.s32 1024, 1024
          %198 = vsyncadd %s191, %s197
          %s199 = sadd.s32 %s25, %s195
          %s200 = smul.addr %s199, 64
          %s201 = scalar_lea.hbm %s0, %s200
          %s202 = sshll.u32 %s194, 4
          %s203 = int_to_ptr.vmem [resolvable:$true] %s202
          %208 = dma.hbm_to_vmem [thread:$0]  %s201, 1024, %s203, %s191, 64, 64, 4
        $region28: #{tpu_custom_call.1} parent=23 // pred_fallthru
          _
      $region24: #{tpu_custom_call.1} parent=5 // pred_fallthru
        _
      %p209 = scmp.le.s32.totalorder 1, %s16
      %p210 = scmp.lt.s32.totalorder %s16, 4
      %p211 = pnand %p209, %p210
      %p212 = pneg %p211
      // Predicated region
      $region29: #{tpu_custom_call.1} parent=5 // pred_check
        _
      $region30: #{tpu_custom_call.1} parent=5 // pred_check_branch
        %214 = sbr.rel (%p211) target = $region32
      $region31: #{tpu_custom_call.1} parent=5 // pred_region
        %s215 = ssub.s32 %s16, 1
        %s216 = sand.u32 %s50, 1
        %s217 = scalar_lea.sflag [#allocation4], %s216
        %s218 = sand.u32 %s50, 1
        %s219 = smul.addr %s218, 64
        %s220 = scalar_lea.vmem [#allocation3], %s219
        // Predicated region
        $region33: #{tpu_custom_call.1} parent=31 // pred_check
          %p221 = pneg %p63
        $region34: #{tpu_custom_call.1} parent=31 // pred_check_branch
          %223 = sbr.rel (%p221) target = $region36
        $region35: #{tpu_custom_call.1} parent=31 // pred_region
          %224 = dma.done %s217, 1024
        $region36: #{tpu_custom_call.1} parent=31 // pred_fallthru
          _
        // Predicated region
        $region37: #{tpu_custom_call.1} parent=31 // pred_check
          %p225 = pneg %p91
        $region38: #{tpu_custom_call.1} parent=31 // pred_check_branch
          %227 = sbr.rel (%p225) target = $region40
        $region39: #{tpu_custom_call.1} parent=31 // pred_region
          %228 = dma.done [#allocation7], 1024
        $region40: #{tpu_custom_call.1} parent=31 // pred_fallthru
          _
        %s229 = sand.u32 %s50, 1
        %s230 = scalar_lea.sflag [#allocation4], %s229
        %s231 = sand.u32 %s50, 1
        %s232 = smul.addr %s231, 64
        %s233 = scalar_lea.vmem [#allocation3], %s232
        %p234 = pneg %p63
        %p235 = pneg %p60
        %p236 = pneg %p91
        %p237 = pneg %p88
        %p238 = scmp.lt.s32.totalorder %s27, 0
        %s239 = scalar_select %p238, %s27, 0
        %s240 = scalar_lea.vmem %s2, %s239
        %p241 = pneg %p117
        %p242 = pneg %p114
        %p243 = pneg %p145
        %p244 = pneg %p142
        %s245 = sand.u32 %s132, 1
        %s246 = scalar_lea.sflag [#allocation5], %s245
        %s247 = sand.u32 %s132, 1
        %s248 = smul.addr %s247, 64
        %s249 = scalar_lea.vmem [#allocation8], %s248
        %s250 = smul.u32 16, %s26
        %s251 = smul.u32 16, %s28
        %p252 = scmp.lt.s32.totalorder %s27, 0
        %s253 = scalar_select %p252, %s27, 0
        %s254 = scalar_lea.vmem %s2, %s253
        %s255 = smul.u32 16, %s26
        %p257 = scmp.eq.s32.totalorder %s28, 0
        // Predicated region
        $region41: #{tpu_custom_call.1} parent=31 // pred_check
          %p258 = pneg %p257
        $region42: #{tpu_custom_call.1} parent=31 // pred_check_branch
          %260 = sbr.rel (%p258) target = $region44
        $region43: #{tpu_custom_call.1} parent=31 // pred_region
          %261 = vst [vmem:[#allocation2] sm:$0xff] 0.0
          %262 = vst [vmem:[#allocation2 + $0x8] sm:$0xff] 0.0
          %263 = vst [vmem:[#allocation2 + $0x10] sm:$0xff] 0.0
          %264 = vst [vmem:[#allocation2 + $0x18] sm:$0xff] 0.0
          %265 = vst [vmem:[#allocation2 + $0x20] sm:$0xff] 0.0
          %266 = vst [vmem:[#allocation2 + $0x28] sm:$0xff] 0.0
          %267 = vst [vmem:[#allocation2 + $0x30] sm:$0xff] 0.0
          %268 = vst [vmem:[#allocation2 + $0x38] sm:$0xff] 0.0
          %269 = vst [vmem:[#allocation2 + $0x40] sm:$0xff] 0.0
          %270 = vst [vmem:[#allocation2 + $0x48] sm:$0xff] 0.0
          %271 = vst [vmem:[#allocation2 + $0x50] sm:$0xff] 0.0
          %272 = vst [vmem:[#allocation2 + $0x58] sm:$0xff] 0.0
          %273 = vst [vmem:[#allocation2 + $0x60] sm:$0xff] 0.0
          %274 = vst [vmem:[#allocation2 + $0x68] sm:$0xff] 0.0
          %275 = vst [vmem:[#allocation2 + $0x70] sm:$0xff] 0.0
          %276 = vst [vmem:[#allocation2 + $0x78] sm:$0xff] 0.0
        $region44: #{tpu_custom_call.1} parent=31 // pred_fallthru
          _
        %v277 = vld [vmem:[%s220] sm:$0xf]
        %v278 = vld [vmem:[%s220 + $0x4] sm:$0xf]
        %v279 = vld [vmem:[%s220 + $0x8] sm:$0xf]
        %v280 = vld [vmem:[%s220 + $0xc] sm:$0xf]
        %v281 = vld [vmem:[%s220 + $0x10] sm:$0xf]
        %v282 = vld [vmem:[%s220 + $0x14] sm:$0xf]
        %v283 = vld [vmem:[%s220 + $0x18] sm:$0xf]
        %v284 = vld [vmem:[%s220 + $0x1c] sm:$0xf]
        %v285 = vld [vmem:[%s220 + $0x20] sm:$0xf]
        %v286 = vld [vmem:[%s220 + $0x24] sm:$0xf]
        %v287 = vld [vmem:[%s220 + $0x28] sm:$0xf]
        %v288 = vld [vmem:[%s220 + $0x2c] sm:$0xf]
        %v289 = vld [vmem:[%s220 + $0x30] sm:$0xf]
        %v290 = vld [vmem:[%s220 + $0x34] sm:$0xf]
        %v291 = vld [vmem:[%s220 + $0x38] sm:$0xf]
        %v292 = vld [vmem:[%s220 + $0x3c] sm:$0xf]
        %v293 = vld [vmem:[#allocation2] sm:$0xff]
        %v294 = vld [vmem:[#allocation2 + $0x8] sm:$0xff]
        %v295 = vld [vmem:[#allocation2 + $0x10] sm:$0xff]
        %v296 = vld [vmem:[#allocation2 + $0x18] sm:$0xff]
        %v297 = vld [vmem:[#allocation2 + $0x20] sm:$0xff]
        %v298 = vld [vmem:[#allocation2 + $0x28] sm:$0xff]
        %v299 = vld [vmem:[#allocation2 + $0x30] sm:$0xff]
        %v300 = vld [vmem:[#allocation2 + $0x38] sm:$0xff]
        %v301 = vld [vmem:[#allocation2 + $0x40] sm:$0xff]
        %v302 = vld [vmem:[#allocation2 + $0x48] sm:$0xff]
        %v303 = vld [vmem:[#allocation2 + $0x50] sm:$0xff]
        %v304 = vld [vmem:[#allocation2 + $0x58] sm:$0xff]
        %v305 = vld [vmem:[#allocation2 + $0x60] sm:$0xff]
        %v306 = vld [vmem:[#allocation2 + $0x68] sm:$0xff]
        %v307 = vld [vmem:[#allocation2 + $0x70] sm:$0xff]
        %v308 = vld [vmem:[#allocation2 + $0x78] sm:$0xff]
        %v309 = vld [vmem:[#allocation6] sm:$0xf]
        %v310 = vld [vmem:[#allocation6 + $0x4] sm:$0xf]
        %v311 = vld [vmem:[#allocation6 + $0x8] sm:$0xf]
        %v312 = vld [vmem:[#allocation6 + $0xc] sm:$0xf]
        %v313 = vld [vmem:[#allocation6 + $0x10] sm:$0xf]
        %v314 = vld [vmem:[#allocation6 + $0x14] sm:$0xf]
        %v315 = vld [vmem:[#allocation6 + $0x18] sm:$0xf]
        %v316 = vld [vmem:[#allocation6 + $0x1c] sm:$0xf]
        %v317 = vld [vmem:[#allocation6 + $0x20] sm:$0xf]
        %v318 = vld [vmem:[#allocation6 + $0x24] sm:$0xf]
        %v319 = vld [vmem:[#allocation6 + $0x28] sm:$0xf]
        %v320 = vld [vmem:[#allocation6 + $0x2c] sm:$0xf]
        %v321 = vld [vmem:[#allocation6 + $0x30] sm:$0xf]
        %v322 = vld [vmem:[#allocation6 + $0x34] sm:$0xf]
        %v323 = vld [vmem:[#allocation6 + $0x38] sm:$0xf]
        %v324 = vld [vmem:[#allocation6 + $0x3c] sm:$0xf]
        %v341 = vunpack.c.l.b16 %v277
        %v342 = vunpack.c.l.b16 %v278
        %v343 = vunpack.c.l.b16 %v279
        %v344 = vunpack.c.l.b16 %v280
        %v345 = vunpack.c.l.b16 %v281
        %v346 = vunpack.c.l.b16 %v282
        %v347 = vunpack.c.l.b16 %v283
        %v348 = vunpack.c.l.b16 %v284
        %v349 = vunpack.c.l.b16 %v285
        %v350 = vunpack.c.l.b16 %v286
        %v351 = vunpack.c.l.b16 %v287
        %v352 = vunpack.c.l.b16 %v288
        %v353 = vunpack.c.l.b16 %v289
        %v354 = vunpack.c.l.b16 %v290
        %v355 = vunpack.c.l.b16 %v291
        %v356 = vunpack.c.l.b16 %v292
        %v357 = vpack.c.b16 %v342, %v341
        %v358 = vpack.c.b16 %v344, %v343
        %v359 = vpack.c.b16 %v346, %v345
        %v360 = vpack.c.b16 %v348, %v347
        %v361 = vpack.c.b16 %v350, %v349
        %v362 = vpack.c.b16 %v352, %v351
        %v363 = vpack.c.b16 %v354, %v353
        %v364 = vpack.c.b16 %v356, %v355
        %v389 = vunpack.c.l.b16 %v309
        %v390 = vunpack.c.l.b16 %v310
        %v391 = vunpack.c.l.b16 %v311
        %v392 = vunpack.c.l.b16 %v312
        %v393 = vunpack.c.l.b16 %v313
        %v394 = vunpack.c.l.b16 %v314
        %v395 = vunpack.c.l.b16 %v315
        %v396 = vunpack.c.l.b16 %v316
        %v397 = vunpack.c.l.b16 %v317
        %v398 = vunpack.c.l.b16 %v318
        %v399 = vunpack.c.l.b16 %v319
        %v400 = vunpack.c.l.b16 %v320
        %v401 = vunpack.c.l.b16 %v321
        %v402 = vunpack.c.l.b16 %v322
        %v403 = vunpack.c.l.b16 %v323
        %v404 = vunpack.c.l.b16 %v324
        %v405 = vpack.c.b16 %v390, %v389
        %v406 = vpack.c.b16 %v392, %v391
        %v407 = vpack.c.b16 %v394, %v393
        %v408 = vpack.c.b16 %v396, %v395
        %v409 = vpack.c.b16 %v398, %v397
        %v410 = vpack.c.b16 %v400, %v399
        %v411 = vpack.c.b16 %v402, %v401
        %v412 = vpack.c.b16 %v404, %v403
        %421 = vmatprep.subr.bf16.mxu0 0
        %422 = vmatpush1.bf16.msra.mxu0 %v405
        %423 = vmatprep.subr.bf16.mxu0 0
        %424 = vmatpush1.bf16.msra.mxu0 %v406
        %425 = vmatprep.subr.bf16.mxu0 0
        %426 = vmatpush1.bf16.msra.mxu0 %v407
        %427 = vmatprep.subr.bf16.mxu0 0
        %428 = vmatpush1.bf16.msra.mxu0 %v408
        %429 = vmatprep.subr.bf16.mxu0 0
        %430 = vmatpush1.bf16.msra.mxu0 %v409
        %431 = vmatprep.subr.bf16.mxu0 0
        %432 = vmatpush1.bf16.msra.mxu0 %v410
        %433 = vmatprep.subr.bf16.mxu0 0
        %434 = vmatpush1.bf16.msra.mxu0 %v411
        %435 = vmatprep.subr.bf16.mxu0 0
        %436 = vmatpush1.bf16.msra.mxu0 %v412
        %437 = vmatprep.subr.bf16.mxu0 0
        %438 = vmatpush1.bf16.msra.mxu0 0
        %439 = vmatprep.subr.bf16.mxu0 0
        %440 = vmatpush1.bf16.msra.mxu0 0
        %441 = vmatprep.subr.bf16.mxu0 0
        %442 = vmatpush1.bf16.msra.mxu0 0
        %443 = vmatprep.subr.bf16.mxu0 0
        %444 = vmatpush1.bf16.msra.mxu0 0
        %445 = vmatprep.subr.bf16.mxu0 0
        %446 = vmatpush1.bf16.msra.mxu0 0
        %447 = vmatprep.subr.bf16.mxu0 0
        %448 = vmatpush1.bf16.msra.mxu0 0
        %449 = vmatprep.subr.bf16.mxu0 0
        %450 = vmatpush1.bf16.msra.mxu0 0
        %451 = vmatprep.subr.bf16.mxu0 0
        %452 = vmatpush1.bf16.msra.mxu0 0
        %453 = vmatprep.mubr.bf16.mxu0 0
        %454 = vmatmul.mubr.bf16.gmra.mrb[0].mxu0 %v357
        %v455 = vpop.f32.mrb[0].mxu0
        %v456 = vadd.f32 0.0, %v455
        %v457 = vpop.f32.mrb[0].mxu0
        %v458 = vpop.f32.mrb[0].mxu0
        %v459 = vadd.f32 0.0, %v458
        %v460 = vpop.f32.mrb[0].mxu0
        %461 = vmatprep.mubr.bf16.mxu0 0
        %462 = vmatmul.mubr.bf16.gmra.mrb[0].mxu0 %v358
        %v463 = vpop.f32.mrb[0].mxu0
        %v464 = vadd.f32 0.0, %v463
        %v465 = vpop.f32.mrb[0].mxu0
        %v466 = vpop.f32.mrb[0].mxu0
        %v467 = vadd.f32 0.0, %v466
        %v468 = vpop.f32.mrb[0].mxu0
        %469 = vmatprep.mubr.bf16.mxu0 0
        %470 = vmatmul.mubr.bf16.gmra.mrb[0].mxu0 %v359
        %v471 = vpop.f32.mrb[0].mxu0
        %v472 = vadd.f32 0.0, %v471
        %v473 = vpop.f32.mrb[0].mxu0
        %v474 = vpop.f32.mrb[0].mxu0
        %v475 = vadd.f32 0.0, %v474
        %v476 = vpop.f32.mrb[0].mxu0
        %477 = vmatprep.mubr.bf16.mxu0 0
        %478 = vmatmul.mubr.bf16.gmra.mrb[0].mxu0 %v360
        %v479 = vpop.f32.mrb[0].mxu0
        %v480 = vadd.f32 0.0, %v479
        %v481 = vpop.f32.mrb[0].mxu0
        %v482 = vpop.f32.mrb[0].mxu0
        %v483 = vadd.f32 0.0, %v482
        %v484 = vpop.f32.mrb[0].mxu0
        %485 = vmatprep.mubr.bf16.mxu0 0
        %486 = vmatmul.mubr.bf16.gmra.mrb[0].mxu0 %v361
        %v487 = vpop.f32.mrb[0].mxu0
        %v488 = vadd.f32 0.0, %v487
        %v489 = vpop.f32.mrb[0].mxu0
        %v490 = vpop.f32.mrb[0].mxu0
        %v491 = vadd.f32 0.0, %v490
        %v492 = vpop.f32.mrb[0].mxu0
        %493 = vmatprep.mubr.bf16.mxu0 0
        %494 = vmatmul.mubr.bf16.gmra.mrb[0].mxu0 %v362
        %v495 = vpop.f32.mrb[0].mxu0
        %v496 = vadd.f32 0.0, %v495
        %v497 = vpop.f32.mrb[0].mxu0
        %v498 = vpop.f32.mrb[0].mxu0
        %v499 = vadd.f32 0.0, %v498
        %v500 = vpop.f32.mrb[0].mxu0
        %501 = vmatprep.mubr.bf16.mxu0 0
        %502 = vmatmul.mubr.bf16.gmra.mrb[0].mxu0 %v363
        %v503 = vpop.f32.mrb[0].mxu0
        %v504 = vadd.f32 0.0, %v503
        %v505 = vpop.f32.mrb[0].mxu0
        %v506 = vpop.f32.mrb[0].mxu0
        %v507 = vadd.f32 0.0, %v506
        %v508 = vpop.f32.mrb[0].mxu0
        %509 = vmatprep.mubr.bf16.mxu0 0
        %510 = vmatmul.mubr.bf16.gmra.mrb[0].mxu0 %v364
        %v511 = vpop.f32.mrb[0].mxu0
        %v512 = vadd.f32 0.0, %v511
        %v513 = vpop.f32.mrb[0].mxu0
        %v514 = vpop.f32.mrb[0].mxu0
        %v515 = vadd.f32 0.0, %v514
        %v516 = vpop.f32.mrb[0].mxu0
        %517 = vdwg.mxu0
        %v518 = vadd.f32 %v293, %v456
        %v519 = vadd.f32 %v294, %v459
        %v520 = vadd.f32 %v295, %v464
        %v521 = vadd.f32 %v296, %v467
        %v522 = vadd.f32 %v297, %v472
        %v523 = vadd.f32 %v298, %v475
        %v524 = vadd.f32 %v299, %v480
        %v525 = vadd.f32 %v300, %v483
        %v526 = vadd.f32 %v301, %v488
        %v527 = vadd.f32 %v302, %v491
        %v528 = vadd.f32 %v303, %v496
        %v529 = vadd.f32 %v304, %v499
        %v530 = vadd.f32 %v305, %v504
        %v531 = vadd.f32 %v306, %v507
        %v532 = vadd.f32 %v307, %v512
        %v533 = vadd.f32 %v308, %v515
        %534 = vst [vmem:[#allocation2] sm:$0xff] %v518
        %535 = vst [vmem:[#allocation2 + $0x8] sm:$0xff] %v519
        %536 = vst [vmem:[#allocation2 + $0x10] sm:$0xff] %v520
        %537 = vst [vmem:[#allocation2 + $0x18] sm:$0xff] %v521
        %538 = vst [vmem:[#allocation2 + $0x20] sm:$0xff] %v522
        %539 = vst [vmem:[#allocation2 + $0x28] sm:$0xff] %v523
        %540 = vst [vmem:[#allocation2 + $0x30] sm:$0xff] %v524
        %541 = vst [vmem:[#allocation2 + $0x38] sm:$0xff] %v525
        %542 = vst [vmem:[#allocation2 + $0x40] sm:$0xff] %v526
        %543 = vst [vmem:[#allocation2 + $0x48] sm:$0xff] %v527
        %544 = vst [vmem:[#allocation2 + $0x50] sm:$0xff] %v528
        %545 = vst [vmem:[#allocation2 + $0x58] sm:$0xff] %v529
        %546 = vst [vmem:[#allocation2 + $0x60] sm:$0xff] %v530
        %547 = vst [vmem:[#allocation2 + $0x68] sm:$0xff] %v531
        %548 = vst [vmem:[#allocation2 + $0x70] sm:$0xff] %v532
        %549 = vst [vmem:[#allocation2 + $0x78] sm:$0xff] %v533
        // Predicated region
        $region45: #{tpu_custom_call.1} parent=31 // pred_check
          %p550 = pneg %p257
        $region46: #{tpu_custom_call.1} parent=31 // pred_check_branch
          %552 = sbr.rel (%p550) target = $region48
        $region47: #{tpu_custom_call.1} parent=31 // pred_region
          %v553 = vld [vmem:[#allocation2] sm:$0xff]
          %v554 = vld [vmem:[#allocation2 + $0x8] sm:$0xff]
          %v555 = vld [vmem:[#allocation2 + $0x10] sm:$0xff]
          %v556 = vld [vmem:[#allocation2 + $0x18] sm:$0xff]
          %v557 = vld [vmem:[#allocation2 + $0x20] sm:$0xff]
          %v558 = vld [vmem:[#allocation2 + $0x28] sm:$0xff]
          %v559 = vld [vmem:[#allocation2 + $0x30] sm:$0xff]
          %v560 = vld [vmem:[#allocation2 + $0x38] sm:$0xff]
          %v561 = vld [vmem:[#allocation2 + $0x40] sm:$0xff]
          %v562 = vld [vmem:[#allocation2 + $0x48] sm:$0xff]
          %v563 = vld [vmem:[#allocation2 + $0x50] sm:$0xff]
          %v564 = vld [vmem:[#allocation2 + $0x58] sm:$0xff]
          %v565 = vld [vmem:[#allocation2 + $0x60] sm:$0xff]
          %v566 = vld [vmem:[#allocation2 + $0x68] sm:$0xff]
          %v567 = vld [vmem:[#allocation2 + $0x70] sm:$0xff]
          %v568 = vld [vmem:[#allocation2 + $0x78] sm:$0xff]
          %v569 = vld [vmem:[%s254] sm:$0x1]
          %v571 = vlaneseq
          %v572 = vshrl.u32 %v571, 7
          %v573 = vsub.s32 0, %v572
          %v574 = vrot.slane %v569, %v573
          %v576 = vadd.f32 %v553, %v574
          %v577 = vadd.f32 %v554, %v574
          %v578 = vadd.f32 %v555, %v574
          %v579 = vadd.f32 %v556, %v574
          %v580 = vadd.f32 %v557, %v574
          %v581 = vadd.f32 %v558, %v574
          %v582 = vadd.f32 %v559, %v574
          %v583 = vadd.f32 %v560, %v574
          %v584 = vadd.f32 %v561, %v574
          %v585 = vadd.f32 %v562, %v574
          %v586 = vadd.f32 %v563, %v574
          %v587 = vadd.f32 %v564, %v574
          %v588 = vadd.f32 %v565, %v574
          %v589 = vadd.f32 %v566, %v574
          %v590 = vadd.f32 %v567, %v574
          %v591 = vadd.f32 %v568, %v574
          %v592 = vpack.c.bf16 %v577, %v576
          %v593 = vpack.c.bf16 %v579, %v578
          %v594 = vpack.c.bf16 %v581, %v580
          %v595 = vpack.c.bf16 %v583, %v582
          %v596 = vpack.c.bf16 %v585, %v584
          %v597 = vpack.c.bf16 %v587, %v586
          %v598 = vpack.c.bf16 %v589, %v588
          %v599 = vpack.c.bf16 %v591, %v590
          %v608 = vunpack.c.l.b16 %v592
          %v609 = vunpack.c.h.b16 %v592
          %v610 = vunpack.c.l.b16 %v593
          %v611 = vunpack.c.h.b16 %v593
          %v612 = vunpack.c.l.b16 %v594
          %v613 = vunpack.c.h.b16 %v594
          %v614 = vunpack.c.l.b16 %v595
          %v615 = vunpack.c.h.b16 %v595
          %v616 = vunpack.c.l.b16 %v596
          %v617 = vunpack.c.h.b16 %v596
          %v618 = vunpack.c.l.b16 %v597
          %v619 = vunpack.c.h.b16 %v597
          %v620 = vunpack.c.l.b16 %v598
          %v621 = vunpack.c.h.b16 %v598
          %v622 = vunpack.c.l.b16 %v599
          %v623 = vunpack.c.h.b16 %v599
          %v624 = vpack.c.b16 %v608, %v608
          %v625 = vpack.c.b16 %v609, %v609
          %v626 = vpack.c.b16 %v610, %v610
          %v627 = vpack.c.b16 %v611, %v611
          %v628 = vpack.c.b16 %v612, %v612
          %v629 = vpack.c.b16 %v613, %v613
          %v630 = vpack.c.b16 %v614, %v614
          %v631 = vpack.c.b16 %v615, %v615
          %v632 = vpack.c.b16 %v616, %v616
          %v633 = vpack.c.b16 %v617, %v617
          %v634 = vpack.c.b16 %v618, %v618
          %v635 = vpack.c.b16 %v619, %v619
          %v636 = vpack.c.b16 %v620, %v620
          %v637 = vpack.c.b16 %v621, %v621
          %v638 = vpack.c.b16 %v622, %v622
          %v639 = vpack.c.b16 %v623, %v623
          %656 = vst [vmem:[%s249] sm:$0xf] %v624
          %657 = vst [vmem:[%s249 + $0x4] sm:$0xf] %v625
          %658 = vst [vmem:[%s249 + $0x8] sm:$0xf] %v626
          %659 = vst [vmem:[%s249 + $0xc] sm:$0xf] %v627
          %660 = vst [vmem:[%s249 + $0x10] sm:$0xf] %v628
          %661 = vst [vmem:[%s249 + $0x14] sm:$0xf] %v629
          %662 = vst [vmem:[%s249 + $0x18] sm:$0xf] %v630
          %663 = vst [vmem:[%s249 + $0x1c] sm:$0xf] %v631
          %664 = vst [vmem:[%s249 + $0x20] sm:$0xf] %v632
          %665 = vst [vmem:[%s249 + $0x24] sm:$0xf] %v633
          %666 = vst [vmem:[%s249 + $0x28] sm:$0xf] %v634
          %667 = vst [vmem:[%s249 + $0x2c] sm:$0xf] %v635
          %668 = vst [vmem:[%s249 + $0x30] sm:$0xf] %v636
          %669 = vst [vmem:[%s249 + $0x34] sm:$0xf] %v637
          %670 = vst [vmem:[%s249 + $0x38] sm:$0xf] %v638
          %671 = vst [vmem:[%s249 + $0x3c] sm:$0xf] %v639
        $region48: #{tpu_custom_call.1} parent=31 // pred_fallthru
          _
        %s672 = sand.u32 %s132, 1
        %s673 = scalar_lea.sflag [#allocation5], %s672
        %s674 = sand.u32 %s132, 1
        %s675 = smul.addr %s674, 64
        %s676 = scalar_lea.vmem [#allocation8], %s675
        // Predicated region
        $region49: #{tpu_custom_call.1} parent=31 // pred_check
          %p677 = pneg %p142
        $region50: #{tpu_custom_call.1} parent=31 // pred_check_branch
          %679 = sbr.rel (%p677) target = $region52
        $region51: #{tpu_custom_call.1} parent=31 // pred_region
          %s680 = smul.u32 16, %s26
          %s682 = ssub.s32 1024, 1024
          %683 = vsyncadd %s673, %s682
          %s684 = sadd.s32 %s27, %s680
          %s685 = smul.addr %s684, 64
          %s686 = scalar_lea.hbm %s3, %s685
          %s687 = sshll.u32 %s676, 4
          %s688 = int_to_ptr.vmem [resolvable:$true] %s687
          %693 = dma.vmem_to_hbm [thread:$0]  %s688, 1024, %s686, %s673, 64, 64, 4
        $region52: #{tpu_custom_call.1} parent=31 // pred_fallthru
          _
      $region32: #{tpu_custom_call.1} parent=5 // pred_fallthru
        _
      %p694 = scmp.le.s32.totalorder 2, %s16
      // Predicated region
      $region53: #{tpu_custom_call.1} parent=5 // pred_check
        %p695 = pneg %p694
      $region54: #{tpu_custom_call.1} parent=5 // pred_check_branch
        %697 = sbr.rel (%p695) target = $region56
      $region55: #{tpu_custom_call.1} parent=5 // pred_region
        %s698 = ssub.s32 %s16, 2
        // Predicated region
        $region57: #{tpu_custom_call.1} parent=55 // pred_check
          %p699 = pneg %p148
        $region58: #{tpu_custom_call.1} parent=55 // pred_check_branch
          %701 = sbr.rel (%p699) target = $region60
        $region59: #{tpu_custom_call.1} parent=55 // pred_region
          %s702 = sand.u32 %s133, 1
          %s703 = scalar_lea.sflag [#allocation5], %s702
          %s704 = sand.u32 %s133, 1
          %s705 = smul.addr %s704, 64
          %s706 = scalar_lea.vmem [#allocation8], %s705
          %707 = dma.done %s703, 1024
        $region60: #{tpu_custom_call.1} parent=55 // pred_fallthru
          _
      $region56: #{tpu_custom_call.1} parent=5 // pred_fallthru
        _
    $region6: #{tpu_custom_call.1} parent=1 // loop_footer
      %s20 = sadd.s32 1, %s16
    $region7: #{tpu_custom_call.1} parent=1 // loop_footer_branch
      %15 = sbr.rel target = $region3
    $region8: #{tpu_custom_call.1} parent=1 // loop_exit
      _
    %708 = vsyncpa [#allocation4], 1
    %s709 = scalar_lea.sflag [#allocation4], 1
    %710 = vsyncpa %s709, 1
    %711 = vsyncpa [#allocation7], 1
    %712 = vsyncpa [#allocation5], 1
    %s713 = scalar_lea.sflag [#allocation5], 1
    %714 = vsyncpa %s713, 1

</llo_original>
